<compile_context>
chip_gen: v7x
topology: tpu7x:2x2x1
jax: 0.10.0
libtpu: 0.0.40
codegen_flags: <defaults>
</compile_context>

<pallas_src>
from functools import partial

import jax
import jax.numpy as jnp
import numpy as np
from jax import lax
from jax.experimental import pallas as pl
from jax.experimental.pallas import tpu as pltpu

_BLOCK_M = 512  # max rows (samples) per grid step


def _round_up(x, m):
    return ((x + m - 1) // m) * m


# ---------------------------------------------------------------------------
# Single fused Pallas kernel:
#   logits = relu(relu(x @ M1 + B1) @ M2 + B2) @ Mf + bf
# ---------------------------------------------------------------------------
def _lietal_fused_kernel(x_ref, m1_ref, b1_ref, m2_ref, b2_ref, mf_ref, bf_ref,
                         o_ref):
    # conv1 (dense-lowered) + ReLU — dominant matmul, bf16 inputs, f32 accumulate
    x = x_ref[...].astype(jnp.bfloat16)
    h1 = jnp.dot(x, m1_ref[...], preferred_element_type=jnp.float32)
    h1 = jnp.maximum(h1 + b1_ref[...], 0.0)
    # conv2 (dense-lowered) + ReLU
    h2 = jnp.dot(h1.astype(jnp.bfloat16), m2_ref[...],
                 preferred_element_type=jnp.float32)
    h2 = jnp.maximum(h2 + b2_ref[...], 0.0)
    # fc — kept f32; class dim pre-padded to 128 so the store is lane-dense
    out = jnp.dot(h2, mf_ref[...], preferred_element_type=jnp.float32)
    o_ref[...] = (out + bf_ref[...]).astype(o_ref.dtype)


def _vmem_limit_bytes(bm, Din, F1p, F2p, Cp):
    x_tile = 2 * bm * Din * 4                                   # double-buffered f32 x
    weights = (Din * F1p * 2 + F1p * F2p * 2 + F2p * Cp * 4     # single-buffered
               + (F1p + F2p + Cp) * 4)
    out_tile = 2 * bm * Cp * 4                                  # double-buffered out
    interm = bm * (F1p + F2p) * 6                               # f32 h1/h2 + bf16 casts
    est = x_tile + weights + out_tile + interm
    return int(min(max(2 * est, 32 << 20), 64 << 20))


@partial(jax.jit, static_argnames=("n_classes",))
def li_et_al_forward(x, prep, n_classes):
    """x: (N, 1, D, H, W) float32 -> logits (N, n_classes)."""
    m1, b1, m2, b2, mf, bf = (prep[k] for k in ("m1", "b1", "m2", "b2", "mf", "bf"))
    N = x.shape[0]
    x2d = x.reshape(N, -1)                       # contiguous flatten -> free
    Din = x2d.shape[1]
    F1p, F2p, Cp = m1.shape[1], m2.shape[1], mf.shape[1]

    # Row tiling: tiny batches stay single-block; larger batches get >=2 grid steps
    # (8-aligned) so the "parallel" axis can shard across v7x's two TensorCores.
    if N <= 8:
        bm = N
    else:
        bm = min(_BLOCK_M, _round_up((N + 1) // 2, 8))

    const = dict(pipeline_mode=pl.Buffered(1))   # weights never change across steps

    logits_p = pl.pallas_call(
        _lietal_fused_kernel,
        out_shape=jax.ShapeDtypeStruct((N, Cp), jnp.float32),
        grid=(pl.cdiv(N, bm),),
        in_specs=[
            pl.BlockSpec((bm, Din), lambda i: (i, 0)),              # activations (tiled)
            pl.BlockSpec((Din, F1p), lambda i: (0, 0), **const),    # conv1 matrix (bf16)
            pl.BlockSpec((1, F1p), lambda i: (0, 0), **const),
            pl.BlockSpec((F1p, F2p), lambda i: (0, 0), **const),    # conv2 matrix (bf16)
            pl.BlockSpec((1, F2p), lambda i: (0, 0), **const),
            pl.BlockSpec((F2p, Cp), lambda i: (0, 0), **const),     # fc matrix (f32)
            pl.BlockSpec((1, Cp), lambda i: (0, 0), **const),
        ],
        out_specs=pl.BlockSpec((bm, Cp), lambda i: (i, 0)),
        compiler_params=pltpu.CompilerParams(
            dimension_semantics=("parallel",),
            vmem_limit_bytes=_vmem_limit_bytes(bm, Din, F1p, F2p, Cp)),
    )(x2d, m1, b1, m2, b2, mf, bf)

    return logits_p[:, :n_classes]               # drop lane padding of the class dim


# ---------------------------------------------------------------------------
# One-time parameter preparation (NOT in the per-forward path)
# ---------------------------------------------------------------------------
def prepare_params(params, input_channels, patch_size):
    """Lower the module weights once into fused-kernel operands.

    Conv3d is linear, so its action on the flattened channel-last activation vector is
    an exact dense matrix (identity-basis probe).  Lane dims (including the class dim)
    are zero-padded to 128 multiples; conv matrices are stored bf16, fc stays f32.
    """
    w1, b1, w2, b2, wf, bf = (params[k] for k in ("w1", "b1", "w2", "b2", "wf", "bf"))
    P, P2, n_classes = w1.shape[0], w2.shape[0], wf.shape[0]
    D, H, W = input_channels, patch_size, patch_size
    D1, H1, W1 = D - 4, H - 2, W - 2          # conv1: pad_d=1, kernel (7,3,3)
    D2, H2, W2 = D1, H1 - 2, W1 - 2           # conv2: pad_d=1, kernel (3,3,3)
    Din, F1, F2 = D * H * W, D1 * H1 * W1 * P, D2 * H2 * W2 * P2

    def conv_matrix(w, n_in_feat, in_shape_cl):
        # Identity basis in channel-last flattening -> exact conv matrix.
        basis = jnp.eye(n_in_feat, dtype=jnp.float32).reshape((n_in_feat,) + in_shape_cl)
        basis = basis.transpose(0, 4, 1, 2, 3)                  # -> NCDHW
        dn = lax.conv_dimension_numbers(basis.shape, w.shape,
                                        ("NCDHW", "OIDHW", "NCDHW"))
        out = lax.conv_general_dilated(basis, w, (1, 1, 1),
                                       ((1, 1), (0, 0), (0, 0)),
                                       dimension_numbers=dn)
        return out.transpose(0, 2, 3, 4, 1).reshape(n_in_feat, -1)   # channel-last cols

    m1 = conv_matrix(w1, Din, (D, H, W, 1))
    m2 = conv_matrix(w2, F1, (D1, H1, W1, P))
    bb1 = jnp.tile(b1, D1 * H1 * W1)          # per-position bias, (d,h,w,c) order
    bb2 = jnp.tile(b2, D2 * H2 * W2)
    # fc: torch flattens (c,d,h,w); kernel features are channel-last (d,h,w,c).
    mf = wf.reshape(n_classes, P2, D2, H2, W2).transpose(0, 2, 3, 4, 1)
    mf = mf.reshape(n_classes, F2).T

    F1p = _round_up(F1, 128)
    F2p = _round_up(F2, 128)
    Cp = _round_up(n_classes, 128)            # lane-dense class dim
    return dict(
        m1=jnp.zeros((Din, F1p), jnp.float32).at[:, :F1].set(m1).astype(jnp.bfloat16),
        b1=jnp.zeros((1, F1p), jnp.float32).at[0, :F1].set(bb1),
        m2=jnp.zeros((F1p, F2p), jnp.float32).at[:F1, :F2].set(m2).astype(jnp.bfloat16),
        b2=jnp.zeros((1, F2p), jnp.float32).at[0, :F2].set(bb2),
        mf=jnp.zeros((F2p, Cp), jnp.float32).at[:F2, :n_classes].set(mf),
        bf=jnp.zeros((1, Cp), jnp.float32).at[0, :n_classes].set(bf),
    )


# ---------------------------------------------------------------------------
# Pure-JAX reference (lax.conv_general_dilated, full f32) for correctness checking
# ---------------------------------------------------------------------------
def li_et_al_reference(x, params):
    w1, b1, w2, b2, wf, bf = (params[k] for k in ("w1", "b1", "w2", "b2", "wf", "bf"))
    dn1 = lax.conv_dimension_numbers(x.shape, w1.shape, ("NCDHW", "OIDHW", "NCDHW"))
    h1 = lax.conv_general_dilated(x, w1, (1, 1, 1), ((1, 1), (0, 0), (0, 0)),
                                  dimension_numbers=dn1)
    h1 = jax.nn.relu(h1 + b1[None, :, None, None, None])
    dn2 = lax.conv_dimension_numbers(h1.shape, w2.shape, ("NCDHW", "OIDHW", "NCDHW"))
    h2 = lax.conv_general_dilated(h1, w2, (1, 1, 1), ((1, 1), (0, 0), (0, 0)),
                                  dimension_numbers=dn2)
    h2 = jax.nn.relu(h2 + b2[None, :, None, None, None])
    feats = h2.reshape(x.shape[0], -1)
    return feats @ wf.T + bf


# ---------------------------------------------------------------------------
# Deterministic parameter init (xavier_uniform weights, zero bias, as in module)
# ---------------------------------------------------------------------------
def init_params(key, input_channels, n_classes, n_planes=2, patch_size=5):
    k1, k2, k3 = jax.random.split(key, 3)

    def xavier(k, shape, fan_in, fan_out):
        bound = (6.0 / (fan_in + fan_out)) ** 0.5
        return jax.random.uniform(k, shape, jnp.float32, -bound, bound)

    w1 = xavier(k1, (n_planes, 1, 7, 3, 3), 1 * 7 * 3 * 3, n_planes * 7 * 3 * 3)
    b1 = jnp.zeros((n_planes,), jnp.float32)
    w2 = xavier(k2, (2 * n_planes, n_planes, 3, 3, 3),
                n_planes * 27, 2 * n_planes * 27)
    b2 = jnp.zeros((2 * n_planes,), jnp.float32)
    features = 2 * n_planes * (input_channels - 4) * (patch_size - 4) ** 2
    wf = xavier(k3, (n_classes, features), features, n_classes)
    bf = jnp.zeros((n_classes,), jnp.float32)
    return dict(w1=w1, b1=b1, w2=w2, b2=b2, wf=wf, bf=bf)


if __name__ == "__main__":
    input_channels, patch_size, n_planes, n_classes, batch = 16, 5, 2, 8, 2

    key = jax.random.PRNGKey(0)
    kx, kp = jax.random.split(key)
    x = jax.random.normal(kx, (batch, 1, input_channels, patch_size, patch_size),
                          jnp.float32)
    params = init_params(kp, input_channels, n_classes, n_planes, patch_size)

    prep = prepare_params(params, input_channels, patch_size)   # one-time lowering

    out = li_et_al_forward(x, prep, n_classes)
    out = jax.block_until_ready(out)

    ref = li_et_al_reference(x, params)
    assert out.shape == (batch, n_classes)
    # bf16 conv matmuls (f32 accumulate) -> loosened tolerance vs full-f32 reference.
    np.testing.assert_allclose(np.asarray(out), np.asarray(ref), rtol=5e-2, atol=5e-2)
    print("KERNEL_OK")
</pallas_src>

<mosaic_0001>
module attributes {stable_mosaic.version = 11 : i64} {
  func.func @_lietal_fused_kernel(%arg0: i32, %arg1: memref<2x400xf32, #tpu.memory_space<vmem>>, %arg2: memref<400x256xbf16, #tpu.memory_space<vmem>>, %arg3: memref<1x256xf32, #tpu.memory_space<vmem>>, %arg4: memref<256x128xbf16, #tpu.memory_space<vmem>>, %arg5: memref<1x128xf32, #tpu.memory_space<vmem>>, %arg6: memref<128x128xf32, #tpu.memory_space<vmem>>, %arg7: memref<1x128xf32, #tpu.memory_space<vmem>>, %arg8: memref<2x128xf32, #tpu.memory_space<vmem>>) attributes {dimension_semantics = [#tpu.dimension_semantics<parallel>], iteration_bounds = array<i64: 1>, scalar_prefetch = 0 : i64, scratch_operands = 0 : i64, tpu.core_type = #tpu.core_type<tc>, window_params = [{transform_indices = @transform_0, window_bounds = array<i64: 2, 400>}, {pipeline_mode = #tpu.pipeline_mode<synchronous>, transform_indices = @transform_1, window_bounds = array<i64: 400, 256>}, {pipeline_mode = #tpu.pipeline_mode<synchronous>, transform_indices = @transform_2, window_bounds = array<i64: 1, 256>}, {pipeline_mode = #tpu.pipeline_mode<synchronous>, transform_indices = @transform_3, window_bounds = array<i64: 256, 128>}, {pipeline_mode = #tpu.pipeline_mode<synchronous>, transform_indices = @transform_4, window_bounds = array<i64: 1, 128>}, {pipeline_mode = #tpu.pipeline_mode<synchronous>, transform_indices = @transform_5, window_bounds = array<i64: 128, 128>}, {pipeline_mode = #tpu.pipeline_mode<synchronous>, transform_indices = @transform_6, window_bounds = array<i64: 1, 128>}, {transform_indices = @transform_7, window_bounds = array<i64: 2, 128>}]} {
    %c0 = arith.constant 0 : index
    %c0_0 = arith.constant 0 : index
    %0 = vector.load %arg1[%c0, %c0_0] : memref<2x400xf32, #tpu.memory_space<vmem>>, vector<2x400xf32>
    %1 = arith.truncf %0 : vector<2x400xf32> to vector<2x400xbf16>
    %c0_1 = arith.constant 0 : index
    %c0_2 = arith.constant 0 : index
    %2 = vector.load %arg2[%c0_1, %c0_2] : memref<400x256xbf16, #tpu.memory_space<vmem>>, vector<400x256xbf16>
    %cst = arith.constant dense<0.000000e+00> : vector<2x256xf32>
    %3 = tpu.matmul %1, %2, %cst {dimension_numbers = #tpu.dot_dimension_numbers<[1], [0], [0], [1], [0, 0, 1, 1], [], []>} : vector<2x400xbf16>, vector<400x256xbf16>, vector<2x256xf32> -> vector<2x256xf32>
    %c0_3 = arith.constant 0 : index
    %c0_4 = arith.constant 0 : index
    %4 = vector.load %arg3[%c0_3, %c0_4] : memref<1x256xf32, #tpu.memory_space<vmem>>, vector<1x256xf32>
    %5 = vector.broadcast %4 : vector<1x256xf32> to vector<2x256xf32>
    %6 = arith.addf %3, %5 : vector<2x256xf32>
    %cst_5 = arith.constant 0.000000e+00 : f32
    %7 = vector.broadcast %cst_5 : f32 to vector<2x256xf32>
    %8 = arith.maximumf %6, %7 : vector<2x256xf32>
    %9 = arith.truncf %8 : vector<2x256xf32> to vector<2x256xbf16>
    %c0_6 = arith.constant 0 : index
    %c0_7 = arith.constant 0 : index
    %10 = vector.load %arg4[%c0_6, %c0_7] : memref<256x128xbf16, #tpu.memory_space<vmem>>, vector<256x128xbf16>
    %cst_8 = arith.constant dense<0.000000e+00> : vector<2x128xf32>
    %11 = tpu.matmul %9, %10, %cst_8 {dimension_numbers = #tpu.dot_dimension_numbers<[1], [0], [0], [1], [0, 0, 1, 1], [], []>} : vector<2x256xbf16>, vector<256x128xbf16>, vector<2x128xf32> -> vector<2x128xf32>
    %c0_9 = arith.constant 0 : index
    %c0_10 = arith.constant 0 : index
    %12 = vector.load %arg5[%c0_9, %c0_10] : memref<1x128xf32, #tpu.memory_space<vmem>>, vector<1x128xf32>
    %13 = vector.broadcast %12 : vector<1x128xf32> to vector<2x128xf32>
    %14 = arith.addf %11, %13 : vector<2x128xf32>
    %cst_11 = arith.constant 0.000000e+00 : f32
    %15 = vector.broadcast %cst_11 : f32 to vector<2x128xf32>
    %16 = arith.maximumf %14, %15 : vector<2x128xf32>
    %c0_12 = arith.constant 0 : index
    %c0_13 = arith.constant 0 : index
    %17 = vector.load %arg6[%c0_12, %c0_13] : memref<128x128xf32, #tpu.memory_space<vmem>>, vector<128x128xf32>
    %cst_14 = arith.constant dense<0.000000e+00> : vector<2x128xf32>
    %18 = tpu.matmul %16, %17, %cst_14 {dimension_numbers = #tpu.dot_dimension_numbers<[1], [0], [0], [1], [0, 0, 1, 1], [], []>} : vector<2x128xf32>, vector<128x128xf32>, vector<2x128xf32> -> vector<2x128xf32>
    %c0_15 = arith.constant 0 : index
    %c0_16 = arith.constant 0 : index
    %19 = vector.load %arg7[%c0_15, %c0_16] : memref<1x128xf32, #tpu.memory_space<vmem>>, vector<1x128xf32>
    %20 = vector.broadcast %19 : vector<1x128xf32> to vector<2x128xf32>
    %21 = arith.addf %18, %20 : vector<2x128xf32>
    %c0_17 = arith.constant 0 : index
    %c0_18 = arith.constant 0 : index
    %22 = vector.load %arg8[%c0_17, %c0_18] : memref<2x128xf32, #tpu.memory_space<vmem>>, vector<2x128xf32>
    tpu.vector_store %arg8[%c0_17, %c0_18], %21 {strides = array<i32>} : memref<2x128xf32, #tpu.memory_space<vmem>>, vector<2x128xf32>,
    return
  }
  func.func @transform_0(%arg0: i32) -> (i32, i32) {
    %c0_i32 = arith.constant 0 : i32
    %c0_i32_0 = arith.constant 0 : i32
    return %arg0, %c0_i32 : i32, i32
  }
  func.func @transform_1(%arg0: i32) -> (i32, i32) {
    %c0_i32 = arith.constant 0 : i32
    %c0_i32_0 = arith.constant 0 : i32
    %c0_i32_1 = arith.constant 0 : i32
    return %c0_i32, %c0_i32_0 : i32, i32
  }
  func.func @transform_2(%arg0: i32) -> (i32, i32) {
    %c0_i32 = arith.constant 0 : i32
    %c0_i32_0 = arith.constant 0 : i32
    %c0_i32_1 = arith.constant 0 : i32
    return %c0_i32, %c0_i32_0 : i32, i32
  }
  func.func @transform_3(%arg0: i32) -> (i32, i32) {
    %c0_i32 = arith.constant 0 : i32
    %c0_i32_0 = arith.constant 0 : i32
    %c0_i32_1 = arith.constant 0 : i32
    return %c0_i32, %c0_i32_0 : i32, i32
  }
  func.func @transform_4(%arg0: i32) -> (i32, i32) {
    %c0_i32 = arith.constant 0 : i32
    %c0_i32_0 = arith.constant 0 : i32
    %c0_i32_1 = arith.constant 0 : i32
    return %c0_i32, %c0_i32_0 : i32, i32
  }
  func.func @transform_5(%arg0: i32) -> (i32, i32) {
    %c0_i32 = arith.constant 0 : i32
    %c0_i32_0 = arith.constant 0 : i32
    %c0_i32_1 = arith.constant 0 : i32
    return %c0_i32, %c0_i32_0 : i32, i32
  }
  func.func @transform_6(%arg0: i32) -> (i32, i32) {
    %c0_i32 = arith.constant 0 : i32
    %c0_i32_0 = arith.constant 0 : i32
    %c0_i32_1 = arith.constant 0 : i32
    return %c0_i32, %c0_i32_0 : i32, i32
  }
  func.func @transform_7(%arg0: i32) -> (i32, i32) {
    %c0_i32 = arith.constant 0 : i32
    %c0_i32_0 = arith.constant 0 : i32
    return %arg0, %c0_i32 : i32, i32
  }
}

</mosaic_0001>

<llo_original>
// kernel: li_et_al_forward.1
$region0: #{li_et_al_forward.1}
  #allocation0 [shape = 'u32[]', space=smem, size = 0x4, offset = 0x4, fixed_abs, tag = 'smem constant byte address 0x4 - core index']
  #allocation1 [shape = 'u32[144,128]{1,0:T(1,128)}', space=vmem, size = 0x12000, scoped, tag = 'internal scratch']
  %s0 = inlined_call_operand.vmem [shape: f32[2,400], index: 0, kind: input, shape index: {}]
  %s1 = inlined_call_operand.vmem [shape: bf16[400,256], index: 1, kind: input, shape index: {}]
  %s2 = inlined_call_operand.vmem [shape: f32[1,256], index: 2, kind: input, shape index: {}]
  %s3 = inlined_call_operand.vmem [shape: bf16[256,128], index: 3, kind: input, shape index: {}]
  %s4 = inlined_call_operand.vmem [shape: f32[1,128], index: 4, kind: input, shape index: {}]
  %s5 = inlined_call_operand.hbm [shape: f32[128,128], index: 5, kind: input, shape index: {}]
  %s6 = inlined_call_operand.vmem [shape: f32[1,128], index: 6, kind: input, shape index: {}]
  %s7 = inlined_call_operand.hbm [shape: f32[2,128], index: 7, kind: output, shape index: {}]
  %s8 = sld [smem:[#allocation0]]
  $region42: #{li_et_al_forward.1} parent=0
    _
  %s10 = ssub.s32 1, %s8
  %s11 = scalar_select 0, %s10, %s8
  $region1: #{li_et_al_forward.1} parent=0
    #allocation2 [shape = 'u8[65536]{0}', space=vmem, size = 0x10000, scoped, tag = 'input window, operand 5, single buffered']
    #allocation3 [shape = 's32[1]{0}', space=sflag, size = 0x4, scoped, tag = 'scoped memory for li_et_al_forward.1']
    #allocation4 [shape = 's32[1]{0}', space=sflag, size = 0x4, scoped, tag = 'scoped memory for li_et_al_forward.1']
    #allocation5 [shape = 'u8[1024]{0}', space=vmem, size = 0x400, scoped, tag = 'output window, operand 0, single buffered']
    %12 = vsyncpa [#allocation3], 0
    %13 = vsyncpa [#allocation4], 0
    // Predicated region
    $region2: #{li_et_al_forward.1} parent=1 // pred_check
      _
    $region3: #{li_et_al_forward.1} parent=1 // pred_check_branch
      %15 = sbr.rel (0) target = $region5
    $region4: #{li_et_al_forward.1} parent=1 // pred_region
      _
    $region5: #{li_et_al_forward.1} parent=1 // pred_fallthru
      _
    // Predicated region
    $region6: #{li_et_al_forward.1} parent=1 // pred_check
      _
    $region7: #{li_et_al_forward.1} parent=1 // pred_check_branch
      %17 = sbr.rel (0) target = $region9
    $region8: #{li_et_al_forward.1} parent=1 // pred_region
      _
    $region9: #{li_et_al_forward.1} parent=1 // pred_fallthru
      _
    // Predicated region
    $region10: #{li_et_al_forward.1} parent=1 // pred_check
      _
    $region11: #{li_et_al_forward.1} parent=1 // pred_check_branch
      %19 = sbr.rel (0) target = $region13
    $region12: #{li_et_al_forward.1} parent=1 // pred_region
      _
    $region13: #{li_et_al_forward.1} parent=1 // pred_fallthru
      _
    // Predicated region
    $region14: #{li_et_al_forward.1} parent=1 // pred_check
      _
    $region15: #{li_et_al_forward.1} parent=1 // pred_check_branch
      %21 = sbr.rel (0) target = $region17
    $region16: #{li_et_al_forward.1} parent=1 // pred_region
      _
    $region17: #{li_et_al_forward.1} parent=1 // pred_fallthru
      _
    // Predicated region
    $region18: #{li_et_al_forward.1} parent=1 // pred_check
      _
    $region19: #{li_et_al_forward.1} parent=1 // pred_check_branch
      %23 = sbr.rel (0) target = $region21
    $region20: #{li_et_al_forward.1} parent=1 // pred_region
      _
    $region21: #{li_et_al_forward.1} parent=1 // pred_fallthru
      _
    // Predicated region
    $region22: #{li_et_al_forward.1} parent=1 // pred_check
      _
    $region23: #{li_et_al_forward.1} parent=1 // pred_check_branch
      %25 = sbr.rel (0) target = $region25
    $region24: #{li_et_al_forward.1} parent=1 // pred_region
      %s27 = ssub.s32 2048, 2048
      %28 = vsyncadd [#allocation3], %s27
      %s29 = sshll.u32 [#allocation2], 4
      %s30 = int_to_ptr.vmem [resolvable:$true] %s29
      %35 = dma.hbm_to_vmem [thread:$0]  %s5, 2048, %s30, [#allocation3], 128, 128, 8
    $region25: #{li_et_al_forward.1} parent=1 // pred_fallthru
      _
    // Predicated region
    $region26: #{li_et_al_forward.1} parent=1 // pred_check
      _
    $region27: #{li_et_al_forward.1} parent=1 // pred_check_branch
      %37 = sbr.rel (0) target = $region29
    $region28: #{li_et_al_forward.1} parent=1 // pred_region
      _
    $region29: #{li_et_al_forward.1} parent=1 // pred_fallthru
      _
    // Predicated region
    $region30: #{li_et_al_forward.1} parent=1 // pred_check
      _
    $region31: #{li_et_al_forward.1} parent=1 // pred_check_branch
      %39 = sbr.rel (0) target = $region33
    $region32: #{li_et_al_forward.1} parent=1 // pred_region
      %40 = dma.done [#allocation3], 2048
    $region33: #{li_et_al_forward.1} parent=1 // pred_fallthru
      _
    %v42 = vld [vmem:[%s0] sm:$0xff]
    %v44 = vcombine.high %v42, %v42
    %v46 = vunpack.c.l.s4 1983009808
    %v47 = vunpack.c.0.s8 %v46
    %v48 = vlaneseq
    %v49 = vshrl.u32 %v48, 7
    %v50 = vsub.s32 %v47, %v49
    %v51 = vrot.slane %v42, %v50
    %v53 = vunpack.c.l.s4 1983009808
    %v54 = vunpack.c.0.s8 %v53
    %v55 = vlaneseq
    %v56 = vshrl.u32 %v55, 7
    %v57 = vsub.s32 %v54, %v56
    %v58 = vrot.slane %v44, %v57
    %v59 = vcombine.high %v51, %v51
    %v60 = vcombine.high %v58, %v58
    %v65 = vpack.c.bf16 %v51, %v51
    %v66 = vpack.c.bf16 %v59, %v59
    %v67 = vpack.c.bf16 %v58, %v58
    %v68 = vpack.c.bf16 %v60, %v60
    %v69 = vld [vmem:[%s1] sm:$0xff]
    %v70 = vld [vmem:[%s1 + $0x8] sm:$0xff]
    %v71 = vld [vmem:[%s1 + $0x10] sm:$0xff]
    %v72 = vld [vmem:[%s1 + $0x18] sm:$0xff]
    %v73 = vld [vmem:[%s1 + $0x20] sm:$0xff]
    %v74 = vld [vmem:[%s1 + $0x28] sm:$0xff]
    %v75 = vld [vmem:[%s1 + $0x30] sm:$0xff]
    %v76 = vld [vmem:[%s1 + $0x38] sm:$0xff]
    %v77 = vld [vmem:[%s1 + $0x40] sm:$0xff]
    %v78 = vld [vmem:[%s1 + $0x48] sm:$0xff]
    %v79 = vld [vmem:[%s1 + $0x50] sm:$0xff]
    %v80 = vld [vmem:[%s1 + $0x58] sm:$0xff]
    %v81 = vld [vmem:[%s1 + $0x60] sm:$0xff]
    %v82 = vld [vmem:[%s1 + $0x68] sm:$0xff]
    %v83 = vld [vmem:[%s1 + $0x70] sm:$0xff]
    %v84 = vld [vmem:[%s1 + $0x78] sm:$0xff]
    %v85 = vld [vmem:[%s1 + $0x80] sm:$0xff]
    %v86 = vld [vmem:[%s1 + $0x88] sm:$0xff]
    %v87 = vld [vmem:[%s1 + $0x90] sm:$0xff]
    %v88 = vld [vmem:[%s1 + $0x98] sm:$0xff]
    %v89 = vld [vmem:[%s1 + $0xa0] sm:$0xff]
    %v90 = vld [vmem:[%s1 + $0xa8] sm:$0xff]
    %v91 = vld [vmem:[%s1 + $0xb0] sm:$0xff]
    %v92 = vld [vmem:[%s1 + $0xb8] sm:$0xff]
    %v93 = vld [vmem:[%s1 + $0xc0] sm:$0xff]
    %v94 = vld [vmem:[%s1 + $0xc8] sm:$0xff]
    %v95 = vld [vmem:[%s1 + $0xd0] sm:$0xff]
    %v96 = vld [vmem:[%s1 + $0xd8] sm:$0xff]
    %v97 = vld [vmem:[%s1 + $0xe0] sm:$0xff]
    %v98 = vld [vmem:[%s1 + $0xe8] sm:$0xff]
    %v99 = vld [vmem:[%s1 + $0xf0] sm:$0xff]
    %v100 = vld [vmem:[%s1 + $0xf8] sm:$0xff]
    %v101 = vld [vmem:[%s1 + $0x100] sm:$0xff]
    %v102 = vld [vmem:[%s1 + $0x108] sm:$0xff]
    %v103 = vld [vmem:[%s1 + $0x110] sm:$0xff]
    %v104 = vld [vmem:[%s1 + $0x118] sm:$0xff]
    %v105 = vld [vmem:[%s1 + $0x120] sm:$0xff]
    %v106 = vld [vmem:[%s1 + $0x128] sm:$0xff]
    %v107 = vld [vmem:[%s1 + $0x130] sm:$0xff]
    %v108 = vld [vmem:[%s1 + $0x138] sm:$0xff]
    %v109 = vld [vmem:[%s1 + $0x140] sm:$0xff]
    %v110 = vld [vmem:[%s1 + $0x148] sm:$0xff]
    %v111 = vld [vmem:[%s1 + $0x150] sm:$0xff]
    %v112 = vld [vmem:[%s1 + $0x158] sm:$0xff]
    %v113 = vld [vmem:[%s1 + $0x160] sm:$0xff]
    %v114 = vld [vmem:[%s1 + $0x168] sm:$0xff]
    %v115 = vld [vmem:[%s1 + $0x170] sm:$0xff]
    %v116 = vld [vmem:[%s1 + $0x178] sm:$0xff]
    %v117 = vld [vmem:[%s1 + $0x180] sm:$0xff]
    %v118 = vld [vmem:[%s1 + $0x188] sm:$0xff]
    %v119 = vld [vmem:[%s2] sm:$0x3]
    %v121 = vlaneseq
    %v122 = vshrl.u32 %v121, 7
    %v123 = vsub.s32 0, %v122
    %v124 = vrot.slane %v119, %v123
    %v125 = vlaneseq
    %v126 = vshrl.u32 %v125, 7
    %v127 = vsub.s32 1, %v126
    %v128 = vrot.slane %v119, %v127
    %v181 = vunpack.c.l.b16 %v69
    %v182 = vunpack.c.h.b16 %v69
    %v183 = vunpack.c.l.b16 %v70
    %v184 = vunpack.c.h.b16 %v70
    %v185 = vunpack.c.l.b16 %v71
    %v186 = vunpack.c.h.b16 %v71
    %v187 = vunpack.c.l.b16 %v72
    %v188 = vunpack.c.h.b16 %v72
    %v189 = vunpack.c.l.b16 %v73
    %v190 = vunpack.c.h.b16 %v73
    %v191 = vunpack.c.l.b16 %v74
    %v192 = vunpack.c.h.b16 %v74
    %v193 = vunpack.c.l.b16 %v75
    %v194 = vunpack.c.h.b16 %v75
    %v195 = vunpack.c.l.b16 %v76
    %v196 = vunpack.c.h.b16 %v76
    %v197 = vunpack.c.l.b16 %v77
    %v198 = vunpack.c.h.b16 %v77
    %v199 = vunpack.c.l.b16 %v78
    %v200 = vunpack.c.h.b16 %v78
    %v201 = vunpack.c.l.b16 %v79
    %v202 = vunpack.c.h.b16 %v79
    %v203 = vunpack.c.l.b16 %v80
    %v204 = vunpack.c.h.b16 %v80
    %v205 = vunpack.c.l.b16 %v81
    %v206 = vunpack.c.h.b16 %v81
    %v207 = vunpack.c.l.b16 %v82
    %v208 = vunpack.c.h.b16 %v82
    %v209 = vunpack.c.l.b16 %v83
    %v210 = vunpack.c.h.b16 %v83
    %v211 = vunpack.c.l.b16 %v84
    %v212 = vunpack.c.h.b16 %v84
    %v213 = vunpack.c.l.b16 %v85
    %v214 = vunpack.c.h.b16 %v85
    %v215 = vunpack.c.l.b16 %v86
    %v216 = vunpack.c.h.b16 %v86
    %v217 = vunpack.c.l.b16 %v87
    %v218 = vunpack.c.h.b16 %v87
    %v219 = vunpack.c.l.b16 %v88
    %v220 = vunpack.c.h.b16 %v88
    %v221 = vunpack.c.l.b16 %v89
    %v222 = vunpack.c.h.b16 %v89
    %v223 = vunpack.c.l.b16 %v90
    %v224 = vunpack.c.h.b16 %v90
    %v225 = vunpack.c.l.b16 %v91
    %v226 = vunpack.c.h.b16 %v91
    %v227 = vunpack.c.l.b16 %v92
    %v228 = vunpack.c.h.b16 %v92
    %v229 = vunpack.c.l.b16 %v93
    %v230 = vunpack.c.h.b16 %v93
    %v231 = vunpack.c.l.b16 %v94
    %v232 = vunpack.c.h.b16 %v94
    %v233 = vunpack.c.l.b16 %v95
    %v234 = vunpack.c.h.b16 %v95
    %v235 = vunpack.c.l.b16 %v96
    %v236 = vunpack.c.h.b16 %v96
    %v237 = vunpack.c.l.b16 %v97
    %v238 = vunpack.c.h.b16 %v97
    %v239 = vunpack.c.l.b16 %v98
    %v240 = vunpack.c.h.b16 %v98
    %v241 = vunpack.c.l.b16 %v99
    %v242 = vunpack.c.h.b16 %v99
    %v243 = vunpack.c.l.b16 %v100
    %v244 = vunpack.c.h.b16 %v100
    %v245 = vunpack.c.l.b16 %v101
    %v246 = vunpack.c.h.b16 %v101
    %v247 = vunpack.c.l.b16 %v102
    %v248 = vunpack.c.h.b16 %v102
    %v249 = vunpack.c.l.b16 %v103
    %v250 = vunpack.c.h.b16 %v103
    %v251 = vunpack.c.l.b16 %v104
    %v252 = vunpack.c.h.b16 %v104
    %v253 = vunpack.c.l.b16 %v105
    %v254 = vunpack.c.h.b16 %v105
    %v255 = vunpack.c.l.b16 %v106
    %v256 = vunpack.c.h.b16 %v106
    %v257 = vunpack.c.l.b16 %v107
    %v258 = vunpack.c.h.b16 %v107
    %v259 = vunpack.c.l.b16 %v108
    %v260 = vunpack.c.h.b16 %v108
    %v261 = vunpack.c.l.b16 %v109
    %v262 = vunpack.c.h.b16 %v109
    %v263 = vunpack.c.l.b16 %v110
    %v264 = vunpack.c.h.b16 %v110
    %v265 = vunpack.c.l.b16 %v111
    %v266 = vunpack.c.h.b16 %v111
    %v267 = vunpack.c.l.b16 %v112
    %v268 = vunpack.c.h.b16 %v112
    %v269 = vunpack.c.l.b16 %v113
    %v270 = vunpack.c.h.b16 %v113
    %v271 = vunpack.c.l.b16 %v114
    %v272 = vunpack.c.h.b16 %v114
    %v273 = vunpack.c.l.b16 %v115
    %v274 = vunpack.c.h.b16 %v115
    %v275 = vunpack.c.l.b16 %v116
    %v276 = vunpack.c.h.b16 %v116
    %v277 = vunpack.c.l.b16 %v117
    %v278 = vunpack.c.h.b16 %v117
    %v279 = vunpack.c.l.b16 %v118
    %v280 = vunpack.c.h.b16 %v118
    %v281 = vpack.c.b16 %v183, %v181
    %v282 = vpack.c.b16 %v184, %v182
    %v283 = vpack.c.b16 %v187, %v185
    %v284 = vpack.c.b16 %v188, %v186
    %v285 = vpack.c.b16 %v191, %v189
    %v286 = vpack.c.b16 %v192, %v190
    %v287 = vpack.c.b16 %v195, %v193
    %v288 = vpack.c.b16 %v196, %v194
    %v289 = vpack.c.b16 %v199, %v197
    %v290 = vpack.c.b16 %v200, %v198
    %v291 = vpack.c.b16 %v203, %v201
    %v292 = vpack.c.b16 %v204, %v202
    %v293 = vpack.c.b16 %v207, %v205
    %v294 = vpack.c.b16 %v208, %v206
    %v295 = vpack.c.b16 %v211, %v209
    %v296 = vpack.c.b16 %v212, %v210
    %v297 = vpack.c.b16 %v215, %v213
    %v298 = vpack.c.b16 %v216, %v214
    %v299 = vpack.c.b16 %v219, %v217
    %v300 = vpack.c.b16 %v220, %v218
    %v301 = vpack.c.b16 %v223, %v221
    %v302 = vpack.c.b16 %v224, %v222
    %v303 = vpack.c.b16 %v227, %v225
    %v304 = vpack.c.b16 %v228, %v226
    %v305 = vpack.c.b16 %v231, %v229
    %v306 = vpack.c.b16 %v232, %v230
    %v307 = vpack.c.b16 %v235, %v233
    %v308 = vpack.c.b16 %v236, %v234
    %v309 = vpack.c.b16 %v239, %v237
    %v310 = vpack.c.b16 %v240, %v238
    %v311 = vpack.c.b16 %v243, %v241
    %v312 = vpack.c.b16 %v244, %v242
    %v313 = vpack.c.b16 %v247, %v245
    %v314 = vpack.c.b16 %v248, %v246
    %v315 = vpack.c.b16 %v251, %v249
    %v316 = vpack.c.b16 %v252, %v250
    %v317 = vpack.c.b16 %v255, %v253
    %v318 = vpack.c.b16 %v256, %v254
    %v319 = vpack.c.b16 %v259, %v257
    %v320 = vpack.c.b16 %v260, %v258
    %v321 = vpack.c.b16 %v263, %v261
    %v322 = vpack.c.b16 %v264, %v262
    %v323 = vpack.c.b16 %v267, %v265
    %v324 = vpack.c.b16 %v268, %v266
    %v325 = vpack.c.b16 %v271, %v269
    %v326 = vpack.c.b16 %v272, %v270
    %v327 = vpack.c.b16 %v275, %v273
    %v328 = vpack.c.b16 %v276, %v274
    %v329 = vpack.c.b16 %v279, %v277
    %v330 = vpack.c.b16 %v280, %v278
    %vm381 = vcmask 130048
    %v383 = vsel %vm381, %v68, 0
    %385 = vmatprep.subr.bf16.mxu0 %v282
    %386 = vmatpush1.bf16.msra.mxu0 %v281
    %387 = vmatprep.subr.bf16.mxu0 %v284
    %388 = vmatpush1.bf16.msra.mxu0 %v283
    %389 = vmatprep.subr.bf16.mxu0 %v286
    %390 = vmatpush1.bf16.msra.mxu0 %v285
    %391 = vmatprep.subr.bf16.mxu0 %v288
    %392 = vmatpush1.bf16.msra.mxu0 %v287
    %393 = vmatprep.subr.bf16.mxu0 %v290
    %394 = vmatpush1.bf16.msra.mxu0 %v289
    %395 = vmatprep.subr.bf16.mxu0 %v292
    %396 = vmatpush1.bf16.msra.mxu0 %v291
    %397 = vmatprep.subr.bf16.mxu0 %v294
    %398 = vmatpush1.bf16.msra.mxu0 %v293
    %399 = vmatprep.subr.bf16.mxu0 %v296
    %400 = vmatpush1.bf16.msra.mxu0 %v295
    %401 = vmatprep.subr.bf16.mxu0 %v298
    %402 = vmatpush1.bf16.msra.mxu0 %v297
    %403 = vmatprep.subr.bf16.mxu0 %v300
    %404 = vmatpush1.bf16.msra.mxu0 %v299
    %405 = vmatprep.subr.bf16.mxu0 %v302
    %406 = vmatpush1.bf16.msra.mxu0 %v301
    %407 = vmatprep.subr.bf16.mxu0 %v304
    %408 = vmatpush1.bf16.msra.mxu0 %v303
    %409 = vmatprep.subr.bf16.mxu0 %v306
    %410 = vmatpush1.bf16.msra.mxu0 %v305
    %411 = vmatprep.subr.bf16.mxu0 %v308
    %412 = vmatpush1.bf16.msra.mxu0 %v307
    %413 = vmatprep.subr.bf16.mxu0 %v310
    %414 = vmatpush1.bf16.msra.mxu0 %v309
    %415 = vmatprep.subr.bf16.mxu0 %v312
    %416 = vmatpush1.bf16.msra.mxu0 %v311
    %417 = vmatprep.mubr.bf16.mxu0 %v66
    %418 = vmatmul.mubr.bf16.gmra.mrb[0].mxu0 %v65
    %v419 = vpop.f32.mrb[0].mxu0
    %v420 = vadd.f32 %v124, %v419
    %v421 = vpop.f32.mrb[0].mxu0
    %v422 = vadd.f32 %v128, %v421
    %v423 = vpop.f32.mrb[0].mxu0
    %v424 = vpop.f32.mrb[0].mxu0
    %425 = vdwg.mxu0
    %426 = vmatprep.subr.bf16.mxu0 %v314
    %427 = vmatpush1.bf16.msra.mxu0 %v313
    %428 = vmatprep.subr.bf16.mxu0 %v316
    %429 = vmatpush1.bf16.msra.mxu0 %v315
    %430 = vmatprep.subr.bf16.mxu0 %v318
    %431 = vmatpush1.bf16.msra.mxu0 %v317
    %432 = vmatprep.subr.bf16.mxu0 %v320
    %433 = vmatpush1.bf16.msra.mxu0 %v319
    %434 = vmatprep.subr.bf16.mxu0 %v322
    %435 = vmatpush1.bf16.msra.mxu0 %v321
    %436 = vmatprep.subr.bf16.mxu0 %v324
    %437 = vmatpush1.bf16.msra.mxu0 %v323
    %438 = vmatprep.subr.bf16.mxu0 %v326
    %439 = vmatpush1.bf16.msra.mxu0 %v325
    %440 = vmatprep.subr.bf16.mxu0 %v328
    %441 = vmatpush1.bf16.msra.mxu0 %v327
    %442 = vmatprep.subr.bf16.mxu0 %v330
    %443 = vmatpush1.bf16.msra.mxu0 %v329
    %444 = vmatprep.subr.bf16.mxu0 0
    %445 = vmatpush1.bf16.msra.mxu0 0
    %446 = vmatprep.subr.bf16.mxu0 0
    %447 = vmatpush1.bf16.msra.mxu0 0
    %448 = vmatprep.subr.bf16.mxu0 0
    %449 = vmatpush1.bf16.msra.mxu0 0
    %450 = vmatprep.subr.bf16.mxu0 0
    %451 = vmatpush1.bf16.msra.mxu0 0
    %452 = vmatprep.subr.bf16.mxu0 0
    %453 = vmatpush1.bf16.msra.mxu0 0
    %454 = vmatprep.subr.bf16.mxu0 0
    %455 = vmatpush1.bf16.msra.mxu0 0
    %456 = vmatprep.subr.bf16.mxu0 0
    %457 = vmatpush1.bf16.msra.mxu0 0
    %458 = vmatprep.mubr.bf16.mxu0 %v383
    %459 = vmatmul.mubr.bf16.gmra.mrb[0].mxu0 %v67
    %v460 = vpop.f32.mrb[0].mxu0
    %v461 = vadd.f32 %v420, %v460
    %v462 = vpop.f32.mrb[0].mxu0
    %v463 = vadd.f32 %v422, %v462
    %v464 = vpop.f32.mrb[0].mxu0
    %v465 = vpop.f32.mrb[0].mxu0
    %466 = vdwg.mxu0
    %v467 = vmax.f32 %v461, 0.0
    %v468 = vmax.f32 %v463, 0.0
    %v469 = vpack.c.bf16 %v467, %v467
    %v470 = vpack.c.bf16 %v468, %v468
    %v471 = vld [vmem:[%s3] sm:$0xf]
    %v472 = vld [vmem:[%s3 + $0x4] sm:$0xf]
    %v473 = vld [vmem:[%s3 + $0x8] sm:$0xf]
    %v474 = vld [vmem:[%s3 + $0xc] sm:$0xf]
    %v475 = vld [vmem:[%s3 + $0x10] sm:$0xf]
    %v476 = vld [vmem:[%s3 + $0x14] sm:$0xf]
    %v477 = vld [vmem:[%s3 + $0x18] sm:$0xf]
    %v478 = vld [vmem:[%s3 + $0x1c] sm:$0xf]
    %v479 = vld [vmem:[%s3 + $0x20] sm:$0xf]
    %v480 = vld [vmem:[%s3 + $0x24] sm:$0xf]
    %v481 = vld [vmem:[%s3 + $0x28] sm:$0xf]
    %v482 = vld [vmem:[%s3 + $0x2c] sm:$0xf]
    %v483 = vld [vmem:[%s3 + $0x30] sm:$0xf]
    %v484 = vld [vmem:[%s3 + $0x34] sm:$0xf]
    %v485 = vld [vmem:[%s3 + $0x38] sm:$0xf]
    %v486 = vld [vmem:[%s3 + $0x3c] sm:$0xf]
    %v487 = vld [vmem:[%s3 + $0x40] sm:$0xf]
    %v488 = vld [vmem:[%s3 + $0x44] sm:$0xf]
    %v489 = vld [vmem:[%s3 + $0x48] sm:$0xf]
    %v490 = vld [vmem:[%s3 + $0x4c] sm:$0xf]
    %v491 = vld [vmem:[%s3 + $0x50] sm:$0xf]
    %v492 = vld [vmem:[%s3 + $0x54] sm:$0xf]
    %v493 = vld [vmem:[%s3 + $0x58] sm:$0xf]
    %v494 = vld [vmem:[%s3 + $0x5c] sm:$0xf]
    %v495 = vld [vmem:[%s3 + $0x60] sm:$0xf]
    %v496 = vld [vmem:[%s3 + $0x64] sm:$0xf]
    %v497 = vld [vmem:[%s3 + $0x68] sm:$0xf]
    %v498 = vld [vmem:[%s3 + $0x6c] sm:$0xf]
    %v499 = vld [vmem:[%s3 + $0x70] sm:$0xf]
    %v500 = vld [vmem:[%s3 + $0x74] sm:$0xf]
    %v501 = vld [vmem:[%s3 + $0x78] sm:$0xf]
    %v502 = vld [vmem:[%s3 + $0x7c] sm:$0xf]
    %v503 = vld [vmem:[%s4] sm:$0x1]
    %v505 = vlaneseq
    %v506 = vshrl.u32 %v505, 7
    %v507 = vsub.s32 0, %v506
    %v508 = vrot.slane %v503, %v507
    %v542 = vunpack.c.l.b16 %v471
    %v543 = vunpack.c.l.b16 %v472
    %v544 = vunpack.c.l.b16 %v473
    %v545 = vunpack.c.l.b16 %v474
    %v546 = vunpack.c.l.b16 %v475
    %v547 = vunpack.c.l.b16 %v476
    %v548 = vunpack.c.l.b16 %v477
    %v549 = vunpack.c.l.b16 %v478
    %v550 = vunpack.c.l.b16 %v479
    %v551 = vunpack.c.l.b16 %v480
    %v552 = vunpack.c.l.b16 %v481
    %v553 = vunpack.c.l.b16 %v482
    %v554 = vunpack.c.l.b16 %v483
    %v555 = vunpack.c.l.b16 %v484
    %v556 = vunpack.c.l.b16 %v485
    %v557 = vunpack.c.l.b16 %v486
    %v558 = vunpack.c.l.b16 %v487
    %v559 = vunpack.c.l.b16 %v488
    %v560 = vunpack.c.l.b16 %v489
    %v561 = vunpack.c.l.b16 %v490
    %v562 = vunpack.c.l.b16 %v491
    %v563 = vunpack.c.l.b16 %v492
    %v564 = vunpack.c.l.b16 %v493
    %v565 = vunpack.c.l.b16 %v494
    %v566 = vunpack.c.l.b16 %v495
    %v567 = vunpack.c.l.b16 %v496
    %v568 = vunpack.c.l.b16 %v497
    %v569 = vunpack.c.l.b16 %v498
    %v570 = vunpack.c.l.b16 %v499
    %v571 = vunpack.c.l.b16 %v500
    %v572 = vunpack.c.l.b16 %v501
    %v573 = vunpack.c.l.b16 %v502
    %v574 = vpack.c.b16 %v543, %v542
    %v575 = vpack.c.b16 %v545, %v544
    %v576 = vpack.c.b16 %v547, %v546
    %v577 = vpack.c.b16 %v549, %v548
    %v578 = vpack.c.b16 %v551, %v550
    %v579 = vpack.c.b16 %v553, %v552
    %v580 = vpack.c.b16 %v555, %v554
    %v581 = vpack.c.b16 %v557, %v556
    %v582 = vpack.c.b16 %v559, %v558
    %v583 = vpack.c.b16 %v561, %v560
    %v584 = vpack.c.b16 %v563, %v562
    %v585 = vpack.c.b16 %v565, %v564
    %v586 = vpack.c.b16 %v567, %v566
    %v587 = vpack.c.b16 %v569, %v568
    %v588 = vpack.c.b16 %v571, %v570
    %v589 = vpack.c.b16 %v573, %v572
    %606 = vmatprep.subr.bf16.mxu0 0
    %607 = vmatpush1.bf16.msra.mxu0 %v574
    %608 = vmatprep.subr.bf16.mxu0 0
    %609 = vmatpush1.bf16.msra.mxu0 %v575
    %610 = vmatprep.subr.bf16.mxu0 0
    %611 = vmatpush1.bf16.msra.mxu0 %v576
    %612 = vmatprep.subr.bf16.mxu0 0
    %613 = vmatpush1.bf16.msra.mxu0 %v577
    %614 = vmatprep.subr.bf16.mxu0 0
    %615 = vmatpush1.bf16.msra.mxu0 %v578
    %616 = vmatprep.subr.bf16.mxu0 0
    %617 = vmatpush1.bf16.msra.mxu0 %v579
    %618 = vmatprep.subr.bf16.mxu0 0
    %619 = vmatpush1.bf16.msra.mxu0 %v580
    %620 = vmatprep.subr.bf16.mxu0 0
    %621 = vmatpush1.bf16.msra.mxu0 %v581
    %622 = vmatprep.subr.bf16.mxu0 0
    %623 = vmatpush1.bf16.msra.mxu0 %v582
    %624 = vmatprep.subr.bf16.mxu0 0
    %625 = vmatpush1.bf16.msra.mxu0 %v583
    %626 = vmatprep.subr.bf16.mxu0 0
    %627 = vmatpush1.bf16.msra.mxu0 %v584
    %628 = vmatprep.subr.bf16.mxu0 0
    %629 = vmatpush1.bf16.msra.mxu0 %v585
    %630 = vmatprep.subr.bf16.mxu0 0
    %631 = vmatpush1.bf16.msra.mxu0 %v586
    %632 = vmatprep.subr.bf16.mxu0 0
    %633 = vmatpush1.bf16.msra.mxu0 %v587
    %634 = vmatprep.subr.bf16.mxu0 0
    %635 = vmatpush1.bf16.msra.mxu0 %v588
    %636 = vmatprep.subr.bf16.mxu0 0
    %637 = vmatpush1.bf16.msra.mxu0 %v589
    %638 = vmatprep.mubr.bf16.mxu0 %v470
    %639 = vmatmul.mubr.bf16.gmra.mrb[0].mxu0 %v469
    %v640 = vpop.f32.mrb[0].mxu0
    %v641 = vadd.f32 %v508, %v640
    %v642 = vpop.f32.mrb[0].mxu0
    %v643 = vpop.f32.mrb[0].mxu0
    %v644 = vpop.f32.mrb[0].mxu0
    %645 = vdwg.mxu0
    %v646 = vmax.f32 %v641, 0.0
    %v647 = vld [vmem:[#allocation2] sm:$0xff]
    %v648 = vld [vmem:[#allocation2 + $0x8] sm:$0xff]
    %v649 = vld [vmem:[#allocation2 + $0x10] sm:$0xff]
    %v650 = vld [vmem:[#allocation2 + $0x18] sm:$0xff]
    %v651 = vld [vmem:[#allocation2 + $0x20] sm:$0xff]
    %v652 = vld [vmem:[#allocation2 + $0x28] sm:$0xff]
    %v653 = vld [vmem:[#allocation2 + $0x30] sm:$0xff]
    %v654 = vld [vmem:[#allocation2 + $0x38] sm:$0xff]
    %v655 = vld [vmem:[#allocation2 + $0x40] sm:$0xff]
    %v656 = vld [vmem:[#allocation2 + $0x48] sm:$0xff]
    %v657 = vld [vmem:[#allocation2 + $0x50] sm:$0xff]
    %v658 = vld [vmem:[#allocation2 + $0x58] sm:$0xff]
    %v659 = vld [vmem:[#allocation2 + $0x60] sm:$0xff]
    %v660 = vld [vmem:[#allocation2 + $0x68] sm:$0xff]
    %v661 = vld [vmem:[#allocation2 + $0x70] sm:$0xff]
    %v662 = vld [vmem:[#allocation2 + $0x78] sm:$0xff]
    %v663 = vld [vmem:[%s6] sm:$0x1]
    %v665 = vlaneseq
    %v666 = vshrl.u32 %v665, 7
    %v667 = vsub.s32 0, %v666
    %v668 = vrot.slane %v663, %v667
    %670 = vmatprep.subr.mxu0 0.0
    %671 = vmatpush1.msra.mxu0 %v647
    %672 = vmatprep.subr.mxu0 0.0
    %673 = vmatpush1.msra.mxu0 %v648
    %674 = vmatprep.subr.mxu0 0.0
    %675 = vmatpush1.msra.mxu0 %v649
    %676 = vmatprep.subr.mxu0 0.0
    %677 = vmatpush1.msra.mxu0 %v650
    %678 = vmatprep.subr.mxu0 0.0
    %679 = vmatpush1.msra.mxu0 %v651
    %680 = vmatprep.subr.mxu0 0.0
    %681 = vmatpush1.msra.mxu0 %v652
    %682 = vmatprep.subr.mxu0 0.0
    %683 = vmatpush1.msra.mxu0 %v653
    %684 = vmatprep.subr.mxu0 0.0
    %685 = vmatpush1.msra.mxu0 %v654
    %686 = vmatprep.subr.mxu0 0.0
    %687 = vmatpush1.msra.mxu0 %v655
    %688 = vmatprep.subr.mxu0 0.0
    %689 = vmatpush1.msra.mxu0 %v656
    %690 = vmatprep.subr.mxu0 0.0
    %691 = vmatpush1.msra.mxu0 %v657
    %692 = vmatprep.subr.mxu0 0.0
    %693 = vmatpush1.msra.mxu0 %v658
    %694 = vmatprep.subr.mxu0 0.0
    %695 = vmatpush1.msra.mxu0 %v659
    %696 = vmatprep.subr.mxu0 0.0
    %697 = vmatpush1.msra.mxu0 %v660
    %698 = vmatprep.subr.mxu0 0.0
    %699 = vmatpush1.msra.mxu0 %v661
    %700 = vmatprep.subr.mxu0 0.0
    %701 = vmatpush1.msra.mxu0 %v662
    %702 = vmatprep.subr.mxu0 0.0
    %703 = vmatpush1.msra.mxu0 0.0
    %704 = vmatprep.subr.mxu0 0.0
    %705 = vmatpush1.msra.mxu0 0.0
    %706 = vmatprep.subr.mxu0 0.0
    %707 = vmatpush1.msra.mxu0 0.0
    %708 = vmatprep.subr.mxu0 0.0
    %709 = vmatpush1.msra.mxu0 0.0
    %710 = vmatprep.subr.mxu0 0.0
    %711 = vmatpush1.msra.mxu0 0.0
    %712 = vmatprep.subr.mxu0 0.0
    %713 = vmatpush1.msra.mxu0 0.0
    %714 = vmatprep.subr.mxu0 0.0
    %715 = vmatpush1.msra.mxu0 0.0
    %716 = vmatprep.subr.mxu0 0.0
    %717 = vmatpush1.msra.mxu0 0.0
    %718 = vmatprep.subr.mxu0 0.0
    %719 = vmatpush1.msra.mxu0 0.0
    %720 = vmatprep.subr.mxu0 0.0
    %721 = vmatpush1.msra.mxu0 0.0
    %722 = vmatprep.subr.mxu0 0.0
    %723 = vmatpush1.msra.mxu0 0.0
    %724 = vmatprep.subr.mxu0 0.0
    %725 = vmatpush1.msra.mxu0 0.0
    %726 = vmatprep.subr.mxu0 0.0
    %727 = vmatpush1.msra.mxu0 0.0
    %728 = vmatprep.subr.mxu0 0.0
    %729 = vmatpush1.msra.mxu0 0.0
    %730 = vmatprep.subr.mxu0 0.0
    %731 = vmatpush1.msra.mxu0 0.0
    %732 = vmatprep.subr.mxu0 0.0
    %733 = vmatpush1.msra.mxu0 0.0
    %734 = vmatprep.mubr.f32.mxu0 0.0
    %735 = vmatmul.mubr.f32.gmra.mrb[0].mxu0 %v646
    %v736 = vpop.f32.mrb[0].mxu0
    %v737 = vadd.f32 %v668, %v736
    %v738 = vpop.f32.mrb[0].mxu0
    %739 = vdwg.mxu0
    %740 = vst [vmem:[#allocation5] sm:$0x3] %v737
    // Predicated region
    $region34: #{li_et_al_forward.1} parent=1 // pred_check
      _
    $region35: #{li_et_al_forward.1} parent=1 // pred_check_branch
      %742 = sbr.rel (0) target = $region37
    $region36: #{li_et_al_forward.1} parent=1 // pred_region
      %s744 = ssub.s32 32, 32
      %745 = vsyncadd [#allocation4], %s744
      %s747 = sshll.u32 [#allocation5], 4
      %s748 = int_to_ptr.vmem [resolvable:$true] %s747
      %750 = dma.vmem_to_hbm [thread:$0]  %s748, 32, %s7, [#allocation4]
    $region37: #{li_et_al_forward.1} parent=1 // pred_fallthru
      _
    // Predicated region
    $region38: #{li_et_al_forward.1} parent=1 // pred_check
      _
    $region39: #{li_et_al_forward.1} parent=1 // pred_check_branch
      %752 = sbr.rel (0) target = $region41
    $region40: #{li_et_al_forward.1} parent=1 // pred_region
      %753 = dma.done [#allocation4], 32
    $region41: #{li_et_al_forward.1} parent=1 // pred_fallthru
      _
    %754 = vsyncpa [#allocation3], 1
    %755 = vsyncpa [#allocation4], 1

</llo_original>
